<compile_context>
chip_gen: v7x
topology: tpu7x:2x2x1
jax: 0.10.0
libtpu: 0.0.40
codegen_flags: <defaults>
</compile_context>

<pallas_src>
import functools

import jax
import jax.numpy as jnp
from jax import lax
from jax.experimental import pallas as pl
from jax.experimental.pallas import tpu as pltpu


def _round_up(n, m):
    return ((n + m - 1) // m) * m


def _hloss_kernel(x_ref, out_ref, *, batch):
    """Per-block partial sum over rows of sum_c softmax*log_softmax."""
    i = pl.program_id(0)
    tb = x_ref.shape[0]

    x = x_ref[...].astype(jnp.float32)                    # (tb, C)

    # Numerically-stable, restructured entropy:
    #   z = x - max, e = exp(z), s = sum(e)
    #   sum_c p*logp = sum_c(e*z)/s - log(s)
    m = jnp.max(x, axis=-1, keepdims=True)                # (tb, 1)
    z = x - m                                             # (tb, C)
    e = jnp.exp(z)                                        # (tb, C)  (EUP)
    s = jnp.sum(e, axis=-1, keepdims=True)                # (tb, 1)
    ez = jnp.sum(e * z, axis=-1, keepdims=True)           # (tb, 1)
    per_row = ez / s - jnp.log(s)                         # (tb, 1)

    if batch % tb != 0:  # static: padded rows exist only in this case
        row_ids = i * tb + lax.broadcasted_iota(jnp.int32, (tb, 1), 0)
        per_row = jnp.where(row_ids < batch, per_row, 0.0)

    out_ref[...] = jnp.sum(per_row).reshape(1, 1, 1)


def hloss(x, *, vmem_tile_budget_bytes=4 * 1024 * 1024):
    """Entropy loss: -mean over rows of sum_c softmax(x)*log_softmax(x)
    (softmax over PyTorch dim=1). Accepts (B, C) or (N, C, *spatial)."""
    if x.ndim != 2:
        # softmax over dim=1: move channels last, flatten positions into rows.
        C = x.shape[1]
        x = jnp.moveaxis(x, 1, -1).reshape(-1, C)
    B, C = x.shape

    # Batch tile: as many rows as fit the per-buffer budget (f32 compute),
    # multiple of 8, no larger than the (8-rounded) batch.
    rows_budget = max(8, (vmem_tile_budget_bytes // (C * 4)) // 8 * 8)
    tb = min(rows_budget, _round_up(B, 8))
    tb = max(8, (tb // 8) * 8)

    pad_b = _round_up(B, tb)
    if pad_b != B:
        x = jnp.pad(x, ((0, pad_b - B), (0, 0)))
    num_blocks = pad_b // tb

    partials = pl.pallas_call(
        functools.partial(_hloss_kernel, batch=B),
        out_shape=jax.ShapeDtypeStruct((num_blocks, 1, 1), jnp.float32),
        grid_spec=pltpu.PrefetchScalarGridSpec(
            num_scalar_prefetch=0,
            grid=(num_blocks,),
            in_specs=[pl.BlockSpec((tb, C), lambda i: (i, 0))],
            out_specs=pl.BlockSpec((1, 1, 1), lambda i: (i, 0, 0)),
        ),
        compiler_params=pltpu.CompilerParams(
            dimension_semantics=("parallel",),
            vmem_limit_bytes=48 * 1024 * 1024,
        ),
        cost_estimate=pl.CostEstimate(
            flops=int(6 * pad_b * C),
            transcendentals=int(pad_b * C),
            bytes_accessed=int(pad_b * C * x.dtype.itemsize + num_blocks * 4),
        ),
    )(x)

    return -jnp.sum(partials) / B


def hloss_ref(x):
    x = x.astype(jnp.float32)
    logp = jax.nn.log_softmax(x, axis=1)
    p = jax.nn.softmax(x, axis=1)
    return -1.0 * jnp.sum(p * logp, axis=1).mean()


if __name__ == "__main__":
    key = jax.random.PRNGKey(0)

    # Primary case: logits (B, C) as used by HLoss.
    B, C = 16, 32
    x = jax.random.normal(key, (B, C), dtype=jnp.float32)
    loss = jax.block_until_ready(hloss(x))
    ref = jax.block_until_ready(hloss_ref(x))
    assert jnp.allclose(loss, ref, atol=1e-5, rtol=1e-5), (loss, ref)

    # Ragged case: exercises the padding + row-masking path.
    x2 = jax.random.normal(jax.random.PRNGKey(1), (10, 7), dtype=jnp.float32)
    loss2 = jax.block_until_ready(hloss(x2))
    ref2 = jax.block_until_ready(hloss_ref(x2))
    assert jnp.allclose(loss2, ref2, atol=1e-5, rtol=1e-5), (loss2, ref2)

    print("KERNEL_OK")
</pallas_src>

<mosaic_0001>
module attributes {stable_mosaic.version = 11 : i64} {
  func.func @_hloss_kernel(%arg0: i32, %arg1: memref<16x32xf32, #tpu.memory_space<vmem>>, %arg2: memref<1x1x1xf32, #tpu.memory_space<vmem>>) attributes {dimension_semantics = [#tpu.dimension_semantics<parallel>], iteration_bounds = array<i64: 1>, scalar_prefetch = 0 : i64, scratch_operands = 0 : i64, tpu.core_type = #tpu.core_type<tc>, window_params = [{transform_indices = @transform_0, window_bounds = array<i64: 16, 32>}, {transform_indices = @transform_1, window_bounds = array<i64: 1, 1, 1>}]} {
    %c0 = arith.constant 0 : index
    %c0_0 = arith.constant 0 : index
    %0 = vector.load %arg1[%c0, %c0_0] : memref<16x32xf32, #tpu.memory_space<vmem>>, vector<16x32xf32>
    %cst = arith.constant dense<0xFF800000> : vector<16xf32>
    %1 = vector.multi_reduction <maximumf>, %0, %cst [1] : vector<16x32xf32> to vector<16xf32>
    %2 = vector.shape_cast %1 : vector<16xf32> to vector<16x1xf32>
    %3 = vector.broadcast %2 : vector<16x1xf32> to vector<16x32xf32>
    %4 = arith.subf %0, %3 : vector<16x32xf32>
    %5 = math.exp %4 : vector<16x32xf32>
    %cst_1 = arith.constant dense<0.000000e+00> : vector<16xf32>
    %6 = vector.multi_reduction <add>, %5, %cst_1 [1] : vector<16x32xf32> to vector<16xf32>
    %7 = vector.shape_cast %6 : vector<16xf32> to vector<16x1xf32>
    %8 = arith.mulf %5, %4 : vector<16x32xf32>
    %cst_2 = arith.constant dense<0.000000e+00> : vector<16xf32>
    %9 = vector.multi_reduction <add>, %8, %cst_2 [1] : vector<16x32xf32> to vector<16xf32>
    %10 = vector.shape_cast %9 : vector<16xf32> to vector<16x1xf32>
    %11 = arith.divf %10, %7 : vector<16x1xf32>
    %12 = math.log %7 : vector<16x1xf32>
    %13 = arith.subf %11, %12 : vector<16x1xf32>
    %14 = vector.shape_cast %13 : vector<16x1xf32> to vector<1x16x1xf32>
    %cst_3 = arith.constant dense<0.000000e+00> : vector<1xf32>
    %15 = vector.multi_reduction <add>, %14, %cst_3 [1, 2] : vector<1x16x1xf32> to vector<1xf32>
    %16 = vector.shape_cast %15 : vector<1xf32> to vector<1x1x1xf32>
    %17 = vector.extract %16[0, 0, 0] : f32 from vector<1x1x1xf32>
    %18 = vector.broadcast %17 : f32 to vector<1x1x1xf32>
    %c0_4 = arith.constant 0 : index
    %c0_5 = arith.constant 0 : index
    %c0_6 = arith.constant 0 : index
    %19 = vector.load %arg2[%c0_4, %c0_5, %c0_6] : memref<1x1x1xf32, #tpu.memory_space<vmem>>, vector<1x1x1xf32>
    tpu.vector_store %arg2[%c0_4, %c0_5, %c0_6], %18 {strides = array<i32>} : memref<1x1x1xf32, #tpu.memory_space<vmem>>, vector<1x1x1xf32>,
    return
  }
  func.func @transform_0(%arg0: i32) -> (i32, i32) {
    %c0_i32 = arith.constant 0 : i32
    %c0_i32_0 = arith.constant 0 : i32
    return %arg0, %c0_i32 : i32, i32
  }
  func.func @transform_1(%arg0: i32) -> (i32, i32, i32) {
    %c0_i32 = arith.constant 0 : i32
    %c0_i32_0 = arith.constant 0 : i32
    %c0_i32_1 = arith.constant 0 : i32
    return %arg0, %c0_i32, %c0_i32_0 : i32, i32, i32
  }
}

</mosaic_0001>

<llo_original>
// kernel: tpu_custom_call.1
$region0: #{tpu_custom_call.1}
  #allocation0 [shape = 'u32[]', space=smem, size = 0x4, offset = 0x4, fixed_abs, tag = 'smem constant byte address 0x4 - core index']
  #allocation1 [shape = 'u32[144,128]{1,0:T(1,128)}', space=vmem, size = 0x12000, scoped, tag = 'internal scratch']
  %s0 = inlined_call_operand.hbm [shape: f32[16,32], index: 0, kind: input, shape index: {}]
  %s1 = inlined_call_operand.hbm [shape: f32[1,1,1], index: 1, kind: output, shape index: {}]
  %s2 = sld [smem:[#allocation0]]
  $region18: #{tpu_custom_call.1} parent=0
    _
  %s4 = ssub.s32 1, %s2
  %s5 = scalar_select 0, %s4, %s2
  $region1: #{tpu_custom_call.1} parent=0
    #allocation2 [shape = 'u8[8192]{0}', space=vmem, size = 0x2000, scoped, tag = 'input window, operand 0, single buffered']
    #allocation3 [shape = 's32[1]{0}', space=sflag, size = 0x4, scoped, tag = 'scoped memory for tpu_custom_call.1']
    #allocation4 [shape = 's32[1]{0}', space=sflag, size = 0x4, scoped, tag = 'scoped memory for tpu_custom_call.1']
    #allocation5 [shape = 'u8[512]{0}', space=vmem, size = 0x400, scoped, tag = 'output window, operand 0, single buffered']
    %6 = vsyncpa [#allocation3], 0
    %7 = vsyncpa [#allocation4], 0
    // Predicated region
    $region2: #{tpu_custom_call.1} parent=1 // pred_check
      _
    $region3: #{tpu_custom_call.1} parent=1 // pred_check_branch
      %9 = sbr.rel (0) target = $region5
    $region4: #{tpu_custom_call.1} parent=1 // pred_region
      %s11 = ssub.s32 256, 256
      %12 = vsyncadd [#allocation3], %s11
      %s13 = sshll.u32 [#allocation2], 4
      %s14 = int_to_ptr.vmem [resolvable:$true] %s13
      %19 = dma.hbm_to_vmem [thread:$0]  %s0, 256, %s14, [#allocation3], 128, 128, 8
    $region5: #{tpu_custom_call.1} parent=1 // pred_fallthru
      _
    // Predicated region
    $region6: #{tpu_custom_call.1} parent=1 // pred_check
      _
    $region7: #{tpu_custom_call.1} parent=1 // pred_check_branch
      %21 = sbr.rel (0) target = $region9
    $region8: #{tpu_custom_call.1} parent=1 // pred_region
      %22 = dma.done [#allocation3], 256
    $region9: #{tpu_custom_call.1} parent=1 // pred_fallthru
      _
    %v23 = vld [vmem:[#allocation2] sm:$0xff]
    %v24 = vld [vmem:[#allocation2 + $0x8] sm:$0xff]
    %vm25 = vcmask 261120
    %v26 = vsel %vm25, %v23, -inf
    %27 = vmax.xlane.f32.xlu0 %v26
    %v28 = vpop.xlane.xlu0 %27
    %v29 = vsel %vm25, %v24, -inf
    %30 = vmax.xlane.f32.xlu0 %v29
    %v31 = vpop.xlane.xlu0 %30
    %v32 = vsub.f32 %v23, %v28
    %v33 = vsub.f32 %v24, %v31
    %v34 = vmul.f32 %v32, 1.442695
    %v35 = vpow.pop %v34
    %v36 = vmul.f32 %v33, 1.442695
    %v37 = vpow.pop %v36
    %v38 = vsel %vm25, %v35, 0.0
    %39 = vadd.xlane.f32.xlu0 %v38
    %v40 = vpop.xlane.xlu0 %39
    %v41 = vsel %vm25, %v37, 0.0
    %42 = vadd.xlane.f32.xlu0 %v41
    %v43 = vpop.xlane.xlu0 %42
    %v44 = vmul.f32 %v35, %v32
    %v45 = vmul.f32 %v37, %v33
    %v46 = vsel %vm25, %v44, 0.0
    %47 = vadd.xlane.f32.xlu0 %v46
    %v48 = vpop.xlane.xlu0 %47
    %v49 = vsel %vm25, %v45, 0.0
    %50 = vadd.xlane.f32.xlu0 %v49
    %v51 = vpop.xlane.xlu0 %50
    %v52 = vrcp.pop %v40
    %v53 = vmul.f32 %v48, %v52
    %v54 = vrcp.pop %v43
    %v55 = vmul.f32 %v51, %v54
    %v56 = vlog2.pop %v40
    %v57 = vmul.f32 %v56, 0.6931472
    %v58 = vlog2.pop %v43
    %v59 = vmul.f32 %v58, 0.6931472
    %v60 = vsub.f32 %v53, %v57
    %v61 = vsub.f32 %v55, %v59
    %vm62 = vcmask 7168
    %v63 = vsel %vm62, %v60, 0.0
    %v64 = vsel %vm62, %v61, 0.0
    %v65 = vadd.f32 %v63, %v64
    %66 = vadd.xlane.f32.xlu0 %v65
    %v67 = vpop.xlane.xlu0 %66
    %v68 = vrot.slane %v67, 4
    %v69 = vadd.f32 %v67, %v68
    %v70 = vrot.slane %v69, 2
    %v71 = vadd.f32 %v69, %v70
    %v72 = vrot.slane %v71, 1
    %v73 = vadd.f32 %v71, %v72
    %s74 = vtos %v73
    %v75 = vstv %s74
    %vm76 = vcmask 0
    %77 = vst.msk [vmem:[#allocation5] sm:$0x1] %vm76, %v75
    // Predicated region
    $region10: #{tpu_custom_call.1} parent=1 // pred_check
      _
    $region11: #{tpu_custom_call.1} parent=1 // pred_check_branch
      %79 = sbr.rel (0) target = $region13
    $region12: #{tpu_custom_call.1} parent=1 // pred_region
      %s81 = ssub.s32 16, 16
      %82 = vsyncadd [#allocation4], %s81
      %s84 = sshll.u32 [#allocation5], 4
      %s85 = int_to_ptr.vmem [resolvable:$true] %s84
      %87 = dma.vmem_to_hbm [thread:$0]  %s85, 16, %s1, [#allocation4]
    $region13: #{tpu_custom_call.1} parent=1 // pred_fallthru
      _
    // Predicated region
    $region14: #{tpu_custom_call.1} parent=1 // pred_check
      _
    $region15: #{tpu_custom_call.1} parent=1 // pred_check_branch
      %89 = sbr.rel (0) target = $region17
    $region16: #{tpu_custom_call.1} parent=1 // pred_region
      %90 = dma.done [#allocation4], 16
    $region17: #{tpu_custom_call.1} parent=1 // pred_fallthru
      _
    %91 = vsyncpa [#allocation3], 1
    %92 = vsyncpa [#allocation4], 1

</llo_original>
